<compile_context>
chip_gen: v6e
topology: v6e:2x2x1
jax: 0.10.0
libtpu: 0.0.40
codegen_flags: <defaults>
</compile_context>

<pallas_src>
import math
from functools import partial

import jax
import jax.numpy as jnp
from jax import lax
from jax.experimental import pallas as pl
from jax.experimental.pallas import tpu as pltpu


_INV_SQRT2 = 1.0 / math.sqrt(2.0)
_TILE_CANDS = (2048, 1024, 512, 256, 128)


def _round_up(x, m):
    return ((x + m - 1) // m) * m


def _gelu(y):
    # exact GELU (matches nn.GELU() default): 0.5*y*(1+erf(y/sqrt(2)))
    return 0.5 * y * (1.0 + lax.erf(y * _INV_SQRT2))


def _vmem_budget_bytes():
    """Generation-aware VMEM budget: ~48 MiB on v7x, ~96 MiB on v5e/v6e."""
    cap = None
    try:
        info = pltpu.get_tpu_info()
        cap = getattr(info, "vmem_capacity_bytes", None)
    except Exception:
        cap = None
    if not cap or cap <= 0:
        cap = 64 * 1024 * 1024  # conservative fallback (v7x-sized)
    return int(min(int(0.75 * cap), 100 * 1024 * 1024))


# ----------------------- fused small-problem kernel ----------------------- #

def _gcn_fused_kernel(a_ref, x_ref, w_ref, b_ref, o_ref, act_ref, *,
                      num_layers):
    """All layers fused; everything VMEM-resident.

    a_ref  : (N_pad, N_pad)      bf16  normalized adjacency
    x_ref  : (N_pad, C_pad)      f32   input features
    w_ref  : (L, C_pad, C_pad)   bf16  per-layer weights
    b_ref  : (L, 1, C_pad)       f32   per-layer biases
    o_ref  : (N_pad, C_pad)      f32   output
    act_ref: (N_pad, C_pad)      f32   activation scratch
    """
    act_ref[...] = x_ref[...]
    for l in range(num_layers):
        xw = jnp.dot(act_ref[...].astype(jnp.bfloat16), w_ref[l],
                     preferred_element_type=jnp.float32)
        y = jnp.dot(a_ref[...], xw.astype(jnp.bfloat16),
                    preferred_element_type=jnp.float32) + b_ref[l]
        act_ref[...] = _gelu(y)
    o_ref[...] = act_ref[...].astype(o_ref.dtype)


def gcn_fused_pallas(a_hat_bf16, x_pad, w_stack, b_stack, *, vmem_limit):
    n_pad, c_pad = x_pad.shape
    num_layers = w_stack.shape[0]
    return pl.pallas_call(
        partial(_gcn_fused_kernel, num_layers=num_layers),
        out_shape=jax.ShapeDtypeStruct((n_pad, c_pad), jnp.float32),
        grid=(1,),
        in_specs=[
            pl.BlockSpec((n_pad, n_pad), lambda i: (0, 0)),
            pl.BlockSpec((n_pad, c_pad), lambda i: (0, 0)),
            pl.BlockSpec((num_layers, c_pad, c_pad), lambda i: (0, 0, 0)),
            pl.BlockSpec((num_layers, 1, c_pad), lambda i: (0, 0, 0)),
        ],
        out_specs=pl.BlockSpec((n_pad, c_pad), lambda i: (0, 0)),
        scratch_shapes=[pltpu.VMEM((n_pad, c_pad), jnp.float32)],
        compiler_params=pltpu.CompilerParams(
            dimension_semantics=("arbitrary",),
            vmem_limit_bytes=vmem_limit),
        cost_estimate=pl.CostEstimate(
            flops=2 * num_layers * (n_pad * n_pad * c_pad
                                    + n_pad * c_pad * c_pad),
            transcendentals=num_layers * n_pad * c_pad,
            bytes_accessed=(n_pad * n_pad * 2 + 2 * n_pad * c_pad * 4
                            + num_layers * c_pad * c_pad * 2),
        ),
    )(a_hat_bf16, x_pad, w_stack, b_stack)


# ---------------------- tiled large-problem kernel ------------------------ #

def _gcn_layer_kernel(a_ref, xw_ref, b_ref, o_ref, *, tk, xw_resident):
    """One GCNConv layer (aggregation + bias + GELU), streamed over K.

    grid = (N_pad // tm, N_pad // tk); axis 0 parallel rows, axis 1 reduction.

    a_ref  : (tm, tk)             bf16  tile of A_hat
    xw_ref : (N_pad, C_pad) resident OR (tk, C_pad) tiled, bf16, XW = X @ W
    b_ref  : (1, C_pad)           f32   bias
    o_ref  : (tm, C_pad)          f32   output tile, resident across k,
                                        used directly as the accumulator.
    """
    k = pl.program_id(1)

    @pl.when(k == 0)
    def _init():
        o_ref[...] = jnp.zeros_like(o_ref)

    if xw_resident:
        start = pl.multiple_of(k * tk, tk)
        xw = xw_ref[pl.ds(start, tk), :]
    else:
        xw = xw_ref[...]

    # MXU: bf16 inputs, f32 accumulation straight into the resident out block.
    o_ref[...] += jnp.dot(a_ref[...], xw, preferred_element_type=jnp.float32)

    @pl.when(k == pl.num_programs(1) - 1)
    def _epilogue():
        o_ref[...] = _gelu(o_ref[...] + b_ref[...])


def _pick_tiles(n_pad, c_pad, budget):
    """Pick (tm, tk, xw_resident) for the tiled per-layer kernel."""
    tile_cands = [c for c in _TILE_CANDS if n_pad % c == 0]
    if not tile_cands:
        tile_cands = [128]

    # Largest row tile that still leaves >=4 (else >=2, else >=1) row tiles,
    # so v7x's two TensorCores can both be fed on the "parallel" axis.
    tm = None
    for min_rows in (4, 2, 1):
        for c in tile_cands:
            if n_pad // c >= min_rows:
                tm = c
                break
        if tm is not None:
            break

    # Keep the whole XW operand VMEM-resident (fetched once) when it fits.
    xw_res_bytes = 2 * n_pad * c_pad * 2  # allow for double-buffering
    xw_resident = xw_res_bytes <= budget // 2

    def fits(tm_, tk_):
        a = 2 * tm_ * tk_ * 2                                  # bf16 A tiles
        xw = xw_res_bytes if xw_resident else 2 * tk_ * c_pad * 2
        out = 2 * tm_ * c_pad * 4                              # f32 out tiles
        bias = 2 * c_pad * 4
        return a + xw + out + bias <= budget

    tk = None
    for c in tile_cands:
        if fits(tm, c):
            tk = c
            break
    while tk is None and tm > 128:
        tm //= 2
        for c in tile_cands:
            if fits(tm, c):
                tk = c
                break
    if tk is None:
        tm, tk = 128, 128
    return tm, tk, xw_resident


def gcn_layer_pallas(a_hat_bf16, xw_bf16, b_pad, *, budget):
    """GELU(A_hat @ XW + b), tiled over (row tiles, K tiles)."""
    n_pad = a_hat_bf16.shape[0]
    c_pad = xw_bf16.shape[1]
    tm, tk, xw_resident = _pick_tiles(n_pad, c_pad, budget)
    grid = (n_pad // tm, n_pad // tk)

    if xw_resident:
        xw_spec = pl.BlockSpec((n_pad, c_pad), lambda i, k: (0, 0))
    else:
        xw_spec = pl.BlockSpec((tk, c_pad), lambda i, k: (k, 0))

    cost = pl.CostEstimate(
        flops=2 * n_pad * n_pad * c_pad,
        transcendentals=n_pad * c_pad,
        bytes_accessed=(n_pad * n_pad * 2
                        + (n_pad * c_pad * 2 if xw_resident
                           else grid[0] * n_pad * c_pad * 2)
                        + n_pad * c_pad * 4
                        + c_pad * 4),
    )

    return pl.pallas_call(
        partial(_gcn_layer_kernel, tk=tk, xw_resident=xw_resident),
        out_shape=jax.ShapeDtypeStruct((n_pad, c_pad), jnp.float32),
        grid=grid,
        in_specs=[
            pl.BlockSpec((tm, tk), lambda i, k: (i, k)),     # A_hat tile
            xw_spec,                                         # XW (resident/tiled)
            pl.BlockSpec((1, c_pad), lambda i, k: (0, 0)),   # bias
        ],
        out_specs=pl.BlockSpec((tm, c_pad), lambda i, k: (i, 0)),
        compiler_params=pltpu.CompilerParams(
            dimension_semantics=("parallel", "arbitrary"),
            vmem_limit_bytes=budget),
        cost_estimate=cost,
    )(a_hat_bf16, xw_bf16, b_pad)


# ------------------------------ JAX glue ---------------------------------- #

def build_normalized_adjacency(edge_index, edge_attr, num_nodes, n_pad):
    """Dense, zero-padded A_hat = D^{-1/2} (A + I) D^{-1/2} (gcn_norm), bf16.

    Scatter-adds straight into a bf16 buffer: no dense f32 intermediate, so
    HBM sees ~N^2*2 bytes written once instead of write/read/write.
    """
    src = edge_index[0]
    dst = edge_index[1]
    # add self loops with weight 1
    loop_idx = jnp.arange(num_nodes, dtype=edge_index.dtype)
    src = jnp.concatenate([src, loop_idx])
    dst = jnp.concatenate([dst, loop_idx])
    w = jnp.concatenate([edge_attr.astype(jnp.float32),
                         jnp.ones((num_nodes,), jnp.float32)])

    # weighted in-degree on the target (col) index
    deg = jnp.zeros((num_nodes,), jnp.float32).at[dst].add(w)
    deg_inv_sqrt = jnp.where(deg > 0, lax.rsqrt(deg), 0.0)
    norm = deg_inv_sqrt[src] * w * deg_inv_sqrt[dst]

    # out[i] = sum_{edges j->i} norm * x[j]   =>   A_hat[i, j] += norm
    a_hat = jnp.zeros((n_pad, n_pad), jnp.bfloat16).at[dst, src].add(
        norm.astype(jnp.bfloat16))
    return a_hat


def gcn_forward(x, edge_index, edge_attr, weights, biases):
    """Full GCN forward: num_layers of (GCNConv + GELU)."""
    n, c = x.shape
    num_layers = len(weights)
    n_pad = _round_up(max(n, 8), 128)
    c_pad = _round_up(max(c, 1), 128)   # lane-dense (>=128) channel layout

    budget = _vmem_budget_bytes()

    a_hat = build_normalized_adjacency(edge_index, edge_attr, n, n_pad)

    x_pad = jnp.zeros((n_pad, c_pad), jnp.float32).at[:n, :c].set(
        x.astype(jnp.float32))

    w_stack = jnp.stack([
        jnp.zeros((c_pad, c_pad), jnp.float32).at[:c, :c].set(w)
        for w in weights]).astype(jnp.bfloat16)            # (L, C_pad, C_pad)
    b_stack = jnp.stack([
        jnp.zeros((1, c_pad), jnp.float32).at[0, :c].set(b)
        for b in biases])                                   # (L, 1, C_pad)

    # Everything-resident fused path when A_hat + activations + weights fit
    # comfortably inside the generation-aware VMEM budget.
    fused_bytes = (n_pad * n_pad * 2 + 3 * n_pad * c_pad * 4
                   + num_layers * c_pad * c_pad * 2
                   + num_layers * c_pad * 4)
    if fused_bytes <= budget // 3:
        x_pad = gcn_fused_pallas(a_hat, x_pad, w_stack, b_stack,
                                 vmem_limit=budget)
    else:
        for l in range(num_layers):
            # Tiny (N*C^2) projection in bf16/DEFAULT; kernel consumes bf16.
            xw = jnp.dot(x_pad.astype(jnp.bfloat16), w_stack[l])
            x_pad = gcn_layer_pallas(a_hat, xw, b_stack[l], budget=budget)

    return x_pad[:n, :c].astype(x.dtype)


def init_params(key, channels, num_layers):
    """Deterministic glorot-uniform weights + zero bias per layer."""
    weights, biases = [], []
    limit = math.sqrt(6.0 / (channels + channels))
    for _ in range(num_layers):
        key, sub = jax.random.split(key)
        w = jax.random.uniform(sub, (channels, channels), jnp.float32,
                               minval=-limit, maxval=limit)
        b = jnp.zeros((channels,), jnp.float32)
        weights.append(w)
        biases.append(b)
    return weights, biases


# --------------------------------- main ------------------------------------ #

if __name__ == "__main__":
    num_nodes = 16
    channels = 8
    num_layers = 2
    num_edges = 32

    key = jax.random.PRNGKey(0)
    k_x, k_e, k_w, k_p = jax.random.split(key, 4)

    # data.x
    x = jax.random.normal(k_x, (num_nodes, channels), jnp.float32)
    # data.edge_index (2, E), data.edge_attr (E,) positive edge weights
    edge_index = jax.random.randint(k_e, (2, num_edges), 0, num_nodes,
                                    dtype=jnp.int32)
    edge_attr = jax.random.uniform(k_w, (num_edges,), jnp.float32,
                                   minval=0.1, maxval=1.0)

    weights, biases = init_params(k_p, channels, num_layers)

    out = jax.jit(gcn_forward)(x, edge_index, edge_attr, weights, biases)
    jax.block_until_ready(out)

    assert out.shape == (num_nodes, channels)
    assert out.dtype == jnp.float32
    print("KERNEL_OK")
</pallas_src>

<mosaic_0001>
module attributes {stable_mosaic.version = 11 : i64} {
  func.func private @main(%arg0: i32) attributes {dimension_semantics = [#tpu.dimension_semantics<core_parallel>], iteration_bounds = array<i64: 2>, tpu.core_type = #tpu.core_type<sc_scalar_subcore>, window_params = []} {
    return
  }
}

module attributes {stable_mosaic.version = 11 : i64} {
  func.func private @main(%arg0: i32) attributes {dimension_semantics = [#tpu.dimension_semantics<core_parallel>], iteration_bounds = array<i64: 2>, tpu.core_type = #tpu.core_type<sc_scalar_subcore>, window_params = []} {
    return
  }
}

module attributes {stable_mosaic.version = 11 : i64} {
  func.func @_gcn_fused_kernel(%arg0: i32, %arg1: memref<128x128xbf16, #tpu.memory_space<vmem>>, %arg2: memref<128x128xf32, #tpu.memory_space<vmem>>, %arg3: memref<2x128x128xbf16, #tpu.memory_space<vmem>>, %arg4: memref<2x1x128xf32, #tpu.memory_space<vmem>>, %arg5: memref<128x128xf32, #tpu.memory_space<vmem>>, %arg6: memref<128x128xf32, #tpu.memory_space<vmem>>) attributes {dimension_semantics = [#tpu.dimension_semantics<arbitrary>], iteration_bounds = array<i64: 1>, scalar_prefetch = 0 : i64, scratch_operands = 1 : i64, tpu.core_type = #tpu.core_type<tc>, window_params = [{pipeline_mode = #tpu.pipeline_mode<synchronous>, transform_indices = @transform_0, window_bounds = array<i64: 128, 128>}, {pipeline_mode = #tpu.pipeline_mode<synchronous>, transform_indices = @transform_1, window_bounds = array<i64: 128, 128>}, {pipeline_mode = #tpu.pipeline_mode<synchronous>, transform_indices = @transform_2, window_bounds = array<i64: 2, 128, 128>}, {pipeline_mode = #tpu.pipeline_mode<synchronous>, transform_indices = @transform_3, window_bounds = array<i64: 2, 1, 128>}, {pipeline_mode = #tpu.pipeline_mode<synchronous>, transform_indices = @transform_4, window_bounds = array<i64: 128, 128>}]} {
    %c0 = arith.constant 0 : index
    %c0_0 = arith.constant 0 : index
    %0 = vector.load %arg2[%c0, %c0_0] : memref<128x128xf32, #tpu.memory_space<vmem>>, vector<128x128xf32>
    %c0_1 = arith.constant 0 : index
    %c0_2 = arith.constant 0 : index
    %1 = vector.load %arg6[%c0_1, %c0_2] : memref<128x128xf32, #tpu.memory_space<vmem>>, vector<128x128xf32>
    tpu.vector_store %arg6[%c0_1, %c0_2], %0 {strides = array<i32>} : memref<128x128xf32, #tpu.memory_space<vmem>>, vector<128x128xf32>,
    %c0_3 = arith.constant 0 : index
    %c0_4 = arith.constant 0 : index
    %2 = vector.load %arg6[%c0_3, %c0_4] : memref<128x128xf32, #tpu.memory_space<vmem>>, vector<128x128xf32>
    %3 = arith.truncf %2 : vector<128x128xf32> to vector<128x128xbf16>
    %c0_5 = arith.constant 0 : index
    %c0_6 = arith.constant 0 : index
    %c0_7 = arith.constant 0 : index
    %4 = vector.load %arg3[%c0_5, %c0_6, %c0_7] : memref<2x128x128xbf16, #tpu.memory_space<vmem>>, vector<1x128x128xbf16>
    %5 = vector.shape_cast %4 : vector<1x128x128xbf16> to vector<128x128xbf16>
    %cst = arith.constant dense<0.000000e+00> : vector<128x128xf32>
    %6 = tpu.matmul %3, %5, %cst {dimension_numbers = #tpu.dot_dimension_numbers<[1], [0], [0], [1], [0, 0, 1, 1], [], []>} : vector<128x128xbf16>, vector<128x128xbf16>, vector<128x128xf32> -> vector<128x128xf32>
    %c0_8 = arith.constant 0 : index
    %c0_9 = arith.constant 0 : index
    %7 = vector.load %arg1[%c0_8, %c0_9] : memref<128x128xbf16, #tpu.memory_space<vmem>>, vector<128x128xbf16>
    %8 = arith.truncf %6 : vector<128x128xf32> to vector<128x128xbf16>
    %cst_10 = arith.constant dense<0.000000e+00> : vector<128x128xf32>
    %9 = tpu.matmul %7, %8, %cst_10 {dimension_numbers = #tpu.dot_dimension_numbers<[1], [0], [0], [1], [0, 0, 1, 1], [], []>} : vector<128x128xbf16>, vector<128x128xbf16>, vector<128x128xf32> -> vector<128x128xf32>
    %c0_11 = arith.constant 0 : index
    %c0_12 = arith.constant 0 : index
    %c0_13 = arith.constant 0 : index
    %10 = vector.load %arg4[%c0_11, %c0_12, %c0_13] : memref<2x1x128xf32, #tpu.memory_space<vmem>>, vector<1x1x128xf32>
    %11 = vector.shape_cast %10 : vector<1x1x128xf32> to vector<1x128xf32>
    %12 = vector.broadcast %11 : vector<1x128xf32> to vector<128x128xf32>
    %13 = arith.addf %9, %12 : vector<128x128xf32>
    %cst_14 = arith.constant 5.000000e-01 : f32
    %14 = vector.broadcast %cst_14 : f32 to vector<128x128xf32>
    %15 = arith.mulf %14, %13 : vector<128x128xf32>
    %cst_15 = arith.constant 0.707106769 : f32
    %16 = vector.broadcast %cst_15 : f32 to vector<128x128xf32>
    %17 = arith.mulf %13, %16 : vector<128x128xf32>
    %18 = math.erf %17 : vector<128x128xf32>
    %cst_16 = arith.constant 1.000000e+00 : f32
    %19 = vector.broadcast %cst_16 : f32 to vector<128x128xf32>
    %20 = arith.addf %19, %18 : vector<128x128xf32>
    %21 = arith.mulf %15, %20 : vector<128x128xf32>
    %c0_17 = arith.constant 0 : index
    %c0_18 = arith.constant 0 : index
    %22 = vector.load %arg6[%c0_17, %c0_18] : memref<128x128xf32, #tpu.memory_space<vmem>>, vector<128x128xf32>
    tpu.vector_store %arg6[%c0_17, %c0_18], %21 {strides = array<i32>} : memref<128x128xf32, #tpu.memory_space<vmem>>, vector<128x128xf32>,
    %c0_19 = arith.constant 0 : index
    %c0_20 = arith.constant 0 : index
    %23 = vector.load %arg6[%c0_19, %c0_20] : memref<128x128xf32, #tpu.memory_space<vmem>>, vector<128x128xf32>
    %24 = arith.truncf %23 : vector<128x128xf32> to vector<128x128xbf16>
    %c1 = arith.constant 1 : index
    %c0_21 = arith.constant 0 : index
    %c0_22 = arith.constant 0 : index
    %25 = vector.load %arg3[%c1, %c0_21, %c0_22] : memref<2x128x128xbf16, #tpu.memory_space<vmem>>, vector<1x128x128xbf16>
    %26 = vector.shape_cast %25 : vector<1x128x128xbf16> to vector<128x128xbf16>
    %cst_23 = arith.constant dense<0.000000e+00> : vector<128x128xf32>
    %27 = tpu.matmul %24, %26, %cst_23 {dimension_numbers = #tpu.dot_dimension_numbers<[1], [0], [0], [1], [0, 0, 1, 1], [], []>} : vector<128x128xbf16>, vector<128x128xbf16>, vector<128x128xf32> -> vector<128x128xf32>
    %c0_24 = arith.constant 0 : index
    %c0_25 = arith.constant 0 : index
    %28 = vector.load %arg1[%c0_24, %c0_25] : memref<128x128xbf16, #tpu.memory_space<vmem>>, vector<128x128xbf16>
    %29 = arith.truncf %27 : vector<128x128xf32> to vector<128x128xbf16>
    %cst_26 = arith.constant dense<0.000000e+00> : vector<128x128xf32>
    %30 = tpu.matmul %28, %29, %cst_26 {dimension_numbers = #tpu.dot_dimension_numbers<[1], [0], [0], [1], [0, 0, 1, 1], [], []>} : vector<128x128xbf16>, vector<128x128xbf16>, vector<128x128xf32> -> vector<128x128xf32>
    %c1_27 = arith.constant 1 : index
    %c0_28 = arith.constant 0 : index
    %c0_29 = arith.constant 0 : index
    %31 = vector.load %arg4[%c1_27, %c0_28, %c0_29] : memref<2x1x128xf32, #tpu.memory_space<vmem>>, vector<1x1x128xf32>
    %32 = vector.shape_cast %31 : vector<1x1x128xf32> to vector<1x128xf32>
    %33 = vector.broadcast %32 : vector<1x128xf32> to vector<128x128xf32>
    %34 = arith.addf %30, %33 : vector<128x128xf32>
    %cst_30 = arith.constant 5.000000e-01 : f32
    %35 = vector.broadcast %cst_30 : f32 to vector<128x128xf32>
    %36 = arith.mulf %35, %34 : vector<128x128xf32>
    %cst_31 = arith.constant 0.707106769 : f32
    %37 = vector.broadcast %cst_31 : f32 to vector<128x128xf32>
    %38 = arith.mulf %34, %37 : vector<128x128xf32>
    %39 = math.erf %38 : vector<128x128xf32>
    %cst_32 = arith.constant 1.000000e+00 : f32
    %40 = vector.broadcast %cst_32 : f32 to vector<128x128xf32>
    %41 = arith.addf %40, %39 : vector<128x128xf32>
    %42 = arith.mulf %36, %41 : vector<128x128xf32>
    %c0_33 = arith.constant 0 : index
    %c0_34 = arith.constant 0 : index
    %43 = vector.load %arg6[%c0_33, %c0_34] : memref<128x128xf32, #tpu.memory_space<vmem>>, vector<128x128xf32>
    tpu.vector_store %arg6[%c0_33, %c0_34], %42 {strides = array<i32>} : memref<128x128xf32, #tpu.memory_space<vmem>>, vector<128x128xf32>,
    %c0_35 = arith.constant 0 : index
    %c0_36 = arith.constant 0 : index
    %44 = vector.load %arg6[%c0_35, %c0_36] : memref<128x128xf32, #tpu.memory_space<vmem>>, vector<128x128xf32>
    %c0_37 = arith.constant 0 : index
    %c0_38 = arith.constant 0 : index
    %45 = vector.load %arg5[%c0_37, %c0_38] : memref<128x128xf32, #tpu.memory_space<vmem>>, vector<128x128xf32>
    tpu.vector_store %arg5[%c0_37, %c0_38], %44 {strides = array<i32>} : memref<128x128xf32, #tpu.memory_space<vmem>>, vector<128x128xf32>,
    return
  }
  func.func @transform_0(%arg0: i32) -> (i32, i32) {
    %c0_i32 = arith.constant 0 : i32
    %c0_i32_0 = arith.constant 0 : i32
    %c0_i32_1 = arith.constant 0 : i32
    return %c0_i32, %c0_i32_0 : i32, i32
  }
  func.func @transform_1(%arg0: i32) -> (i32, i32) {
    %c0_i32 = arith.constant 0 : i32
    %c0_i32_0 = arith.constant 0 : i32
    %c0_i32_1 = arith.constant 0 : i32
    return %c0_i32, %c0_i32_0 : i32, i32
  }
  func.func @transform_2(%arg0: i32) -> (i32, i32, i32) {
    %c0_i32 = arith.constant 0 : i32
    %c0_i32_0 = arith.constant 0 : i32
    %c0_i32_1 = arith.constant 0 : i32
    %c0_i32_2 = arith.constant 0 : i32
    return %c0_i32, %c0_i32_0, %c0_i32_1 : i32, i32, i32
  }
  func.func @transform_3(%arg0: i32) -> (i32, i32, i32) {
    %c0_i32 = arith.constant 0 : i32
    %c0_i32_0 = arith.constant 0 : i32
    %c0_i32_1 = arith.constant 0 : i32
    %c0_i32_2 = arith.constant 0 : i32
    return %c0_i32, %c0_i32_0, %c0_i32_1 : i32, i32, i32
  }
  func.func @transform_4(%arg0: i32) -> (i32, i32) {
    %c0_i32 = arith.constant 0 : i32
    %c0_i32_0 = arith.constant 0 : i32
    %c0_i32_1 = arith.constant 0 : i32
    return %c0_i32, %c0_i32_0 : i32, i32
  }
}

</mosaic_0001>

<llo_original>
// kernel: gcn_forward.1
$region0: #{gcn_forward.1}
  #allocation0 [shape = 'u32[]', space=smem, size = 0x4, offset = 0x4, fixed_abs, tag = 'smem constant byte address 0x4 - core index']
  #allocation1 [shape = 'u32[144,128]{1,0:T(1,128)}', space=vmem, size = 0x12000, scoped, tag = 'internal scratch']
  #allocation2 [shape = 'f32[128,128]{1,0:T(8,128)}', space=vmem, size = 0x10000, scoped, tag = 'scratch operand']
  %s0 = inlined_call_operand.vmem [shape: bf16[128,128], index: 0, kind: input, shape index: {}]
  %s1 = inlined_call_operand.vmem [shape: f32[128,128], index: 1, kind: input, shape index: {}]
  %s2 = inlined_call_operand.vmem [shape: bf16[2,128,128], index: 2, kind: input, shape index: {}]
  %s3 = inlined_call_operand.vmem [shape: f32[2,1,128], index: 3, kind: input, shape index: {}]
  %s4 = inlined_call_operand.vmem [shape: f32[128,128], index: 4, kind: output, shape index: {}]
  %s5 = sld [smem:[#allocation0]]
  $region26: #{gcn_forward.1} parent=0
    _
  %s7 = ssub.s32 1, %s5
  %s8 = scalar_select 0, %s7, %s5
  // Predicated region
  $region2: #{gcn_forward.1} parent=0 // pred_check
    _
  $region3: #{gcn_forward.1} parent=0 // pred_check_branch
    %10 = sbr.rel (0) target = $region5
  $region4: #{gcn_forward.1} parent=0 // pred_region
    _
  $region5: #{gcn_forward.1} parent=0 // pred_fallthru
    _
  // Predicated region
  $region6: #{gcn_forward.1} parent=0 // pred_check
    _
  $region7: #{gcn_forward.1} parent=0 // pred_check_branch
    %12 = sbr.rel (0) target = $region9
  $region8: #{gcn_forward.1} parent=0 // pred_region
    _
  $region9: #{gcn_forward.1} parent=0 // pred_fallthru
    _
  // Predicated region
  $region10: #{gcn_forward.1} parent=0 // pred_check
    _
  $region11: #{gcn_forward.1} parent=0 // pred_check_branch
    %14 = sbr.rel (0) target = $region13
  $region12: #{gcn_forward.1} parent=0 // pred_region
    _
  $region13: #{gcn_forward.1} parent=0 // pred_fallthru
    _
  // Predicated region
  $region14: #{gcn_forward.1} parent=0 // pred_check
    _
  $region15: #{gcn_forward.1} parent=0 // pred_check_branch
    %16 = sbr.rel (0) target = $region17
  $region16: #{gcn_forward.1} parent=0 // pred_region
    _
  $region17: #{gcn_forward.1} parent=0 // pred_fallthru
    _
  %v18 = vld [vmem:[%s1] sm:$0xff]
  %v19 = vld [vmem:[%s1 + $0x8] sm:$0xff]
  %v20 = vld [vmem:[%s1 + $0x10] sm:$0xff]
  %v21 = vld [vmem:[%s1 + $0x18] sm:$0xff]
  %v22 = vld [vmem:[%s1 + $0x20] sm:$0xff]
  %v23 = vld [vmem:[%s1 + $0x28] sm:$0xff]
  %v24 = vld [vmem:[%s1 + $0x30] sm:$0xff]
  %v25 = vld [vmem:[%s1 + $0x38] sm:$0xff]
  %v26 = vld [vmem:[%s1 + $0x40] sm:$0xff]
  %v27 = vld [vmem:[%s1 + $0x48] sm:$0xff]
  %v28 = vld [vmem:[%s1 + $0x50] sm:$0xff]
  %v29 = vld [vmem:[%s1 + $0x58] sm:$0xff]
  %v30 = vld [vmem:[%s1 + $0x60] sm:$0xff]
  %v31 = vld [vmem:[%s1 + $0x68] sm:$0xff]
  %v32 = vld [vmem:[%s1 + $0x70] sm:$0xff]
  %v33 = vld [vmem:[%s1 + $0x78] sm:$0xff]
  %34 = vst [vmem:[#allocation2] sm:$0xff] %v18
  %35 = vst [vmem:[#allocation2 + $0x8] sm:$0xff] %v19
  %36 = vst [vmem:[#allocation2 + $0x10] sm:$0xff] %v20
  %37 = vst [vmem:[#allocation2 + $0x18] sm:$0xff] %v21
  %38 = vst [vmem:[#allocation2 + $0x20] sm:$0xff] %v22
  %39 = vst [vmem:[#allocation2 + $0x28] sm:$0xff] %v23
  %40 = vst [vmem:[#allocation2 + $0x30] sm:$0xff] %v24
  %41 = vst [vmem:[#allocation2 + $0x38] sm:$0xff] %v25
  %42 = vst [vmem:[#allocation2 + $0x40] sm:$0xff] %v26
  %43 = vst [vmem:[#allocation2 + $0x48] sm:$0xff] %v27
  %44 = vst [vmem:[#allocation2 + $0x50] sm:$0xff] %v28
  %45 = vst [vmem:[#allocation2 + $0x58] sm:$0xff] %v29
  %46 = vst [vmem:[#allocation2 + $0x60] sm:$0xff] %v30
  %47 = vst [vmem:[#allocation2 + $0x68] sm:$0xff] %v31
  %48 = vst [vmem:[#allocation2 + $0x70] sm:$0xff] %v32
  %49 = vst [vmem:[#allocation2 + $0x78] sm:$0xff] %v33
  %v50 = vld [vmem:[#allocation2] sm:$0xff]
  %v51 = vld [vmem:[#allocation2 + $0x8] sm:$0xff]
  %v52 = vld [vmem:[#allocation2 + $0x10] sm:$0xff]
  %v53 = vld [vmem:[#allocation2 + $0x18] sm:$0xff]
  %v54 = vld [vmem:[#allocation2 + $0x20] sm:$0xff]
  %v55 = vld [vmem:[#allocation2 + $0x28] sm:$0xff]
  %v56 = vld [vmem:[#allocation2 + $0x30] sm:$0xff]
  %v57 = vld [vmem:[#allocation2 + $0x38] sm:$0xff]
  %v58 = vld [vmem:[#allocation2 + $0x40] sm:$0xff]
  %v59 = vld [vmem:[#allocation2 + $0x48] sm:$0xff]
  %v60 = vld [vmem:[#allocation2 + $0x50] sm:$0xff]
  %v61 = vld [vmem:[#allocation2 + $0x58] sm:$0xff]
  %v62 = vld [vmem:[#allocation2 + $0x60] sm:$0xff]
  %v63 = vld [vmem:[#allocation2 + $0x68] sm:$0xff]
  %v64 = vld [vmem:[#allocation2 + $0x70] sm:$0xff]
  %v65 = vld [vmem:[#allocation2 + $0x78] sm:$0xff]
  %v66 = vpack.c.bf16 %v51, %v50
  %v67 = vpack.c.bf16 %v53, %v52
  %v68 = vpack.c.bf16 %v55, %v54
  %v69 = vpack.c.bf16 %v57, %v56
  %v70 = vpack.c.bf16 %v59, %v58
  %v71 = vpack.c.bf16 %v61, %v60
  %v72 = vpack.c.bf16 %v63, %v62
  %v73 = vpack.c.bf16 %v65, %v64
  %v74 = vld [vmem:[%s2] sm:$0xf]
  %v75 = vld [vmem:[%s2 + $0x4] sm:$0xf]
  %v76 = vld [vmem:[%s2 + $0x8] sm:$0xf]
  %v77 = vld [vmem:[%s2 + $0xc] sm:$0xf]
  %v78 = vld [vmem:[%s2 + $0x10] sm:$0xf]
  %v79 = vld [vmem:[%s2 + $0x14] sm:$0xf]
  %v80 = vld [vmem:[%s2 + $0x18] sm:$0xf]
  %v81 = vld [vmem:[%s2 + $0x1c] sm:$0xf]
  %v82 = vld [vmem:[%s2 + $0x20] sm:$0xf]
  %v83 = vld [vmem:[%s2 + $0x24] sm:$0xf]
  %v84 = vld [vmem:[%s2 + $0x28] sm:$0xf]
  %v85 = vld [vmem:[%s2 + $0x2c] sm:$0xf]
  %v86 = vld [vmem:[%s2 + $0x30] sm:$0xf]
  %v87 = vld [vmem:[%s2 + $0x34] sm:$0xf]
  %v88 = vld [vmem:[%s2 + $0x38] sm:$0xf]
  %v89 = vld [vmem:[%s2 + $0x3c] sm:$0xf]
  %v106 = vunpack.c.l.b16 %v74
  %v107 = vunpack.c.l.b16 %v75
  %v108 = vunpack.c.l.b16 %v76
  %v109 = vunpack.c.l.b16 %v77
  %v110 = vunpack.c.l.b16 %v78
  %v111 = vunpack.c.l.b16 %v79
  %v112 = vunpack.c.l.b16 %v80
  %v113 = vunpack.c.l.b16 %v81
  %v114 = vunpack.c.l.b16 %v82
  %v115 = vunpack.c.l.b16 %v83
  %v116 = vunpack.c.l.b16 %v84
  %v117 = vunpack.c.l.b16 %v85
  %v118 = vunpack.c.l.b16 %v86
  %v119 = vunpack.c.l.b16 %v87
  %v120 = vunpack.c.l.b16 %v88
  %v121 = vunpack.c.l.b16 %v89
  %v122 = vpack.c.b16 %v107, %v106
  %v123 = vpack.c.b16 %v109, %v108
  %v124 = vpack.c.b16 %v111, %v110
  %v125 = vpack.c.b16 %v113, %v112
  %v126 = vpack.c.b16 %v115, %v114
  %v127 = vpack.c.b16 %v117, %v116
  %v128 = vpack.c.b16 %v119, %v118
  %v129 = vpack.c.b16 %v121, %v120
  %138 = vmatprep.subr.bf16.mxu0 0
  %139 = vmatpush1.bf16.msra.mxu0 %v129
  %140 = vmatprep.subr.bf16.mxu0 0
  %141 = vmatpush1.bf16.msra.mxu0 %v128
  %142 = vmatprep.subr.bf16.mxu0 0
  %143 = vmatpush1.bf16.msra.mxu0 %v127
  %144 = vmatprep.subr.bf16.mxu0 0
  %145 = vmatpush1.bf16.msra.mxu0 %v126
  %146 = vmatprep.subr.bf16.mxu0 0
  %147 = vmatpush1.bf16.msra.mxu0 %v125
  %148 = vmatprep.subr.bf16.mxu0 0
  %149 = vmatpush1.bf16.msra.mxu0 %v124
  %150 = vmatprep.subr.bf16.mxu0 0
  %151 = vmatpush1.bf16.msra.mxu0 %v123
  %152 = vmatprep.subr.bf16.mxu0 0
  %153 = vmatpush1.bf16.msra.mxu0 %v122
  %154 = vmatprep.subr.bf16.mxu0 0
  %155 = vmatpush2.bf16.msra.mxu0 0
  %156 = vmatprep.subr.bf16.mxu0 0
  %157 = vmatpush2.bf16.msra.mxu0 0
  %158 = vmatprep.subr.bf16.mxu0 0
  %159 = vmatpush2.bf16.msra.mxu0 0
  %160 = vmatprep.subr.bf16.mxu0 0
  %161 = vmatpush2.bf16.msra.mxu0 0
  %162 = vmatprep.subr.bf16.mxu0 0
  %163 = vmatpush2.bf16.msra.mxu0 0
  %164 = vmatprep.subr.bf16.mxu0 0
  %165 = vmatpush2.bf16.msra.mxu0 0
  %166 = vmatprep.subr.bf16.mxu0 0
  %167 = vmatpush2.bf16.msra.mxu0 0
  %168 = vmatprep.subr.bf16.mxu0 0
  %169 = vmatpush2.bf16.msra.mxu0 0
  %170 = vmatprep.mubr.bf16.mxu0 0
  %171 = vmatmul.mubr.bf16.gmra.mxu0 %v66
  %v172 = vpop.f32.mrf.mxu0
  %v173 = vadd.f32 0.0, %v172
  %v174 = vpop.f32.mrf.mxu0
  %v175 = vpop.f32.mrf.mxu0
  %v176 = vadd.f32 0.0, %v175
  %v177 = vpop.f32.mrf.mxu0
  %178 = vmatprep.mubr.bf16.mxu0 0
  %179 = vmatmul.mubr.bf16.gmra.mxu0 %v67
  %v180 = vpop.f32.mrf.mxu0
  %v181 = vadd.f32 0.0, %v180
  %v182 = vpop.f32.mrf.mxu0
  %v183 = vpop.f32.mrf.mxu0
  %v184 = vadd.f32 0.0, %v183
  %v185 = vpop.f32.mrf.mxu0
  %186 = vmatprep.mubr.bf16.mxu0 0
  %187 = vmatmul.mubr.bf16.gmra.mxu0 %v68
  %v188 = vpop.f32.mrf.mxu0
  %v189 = vadd.f32 0.0, %v188
  %v190 = vpop.f32.mrf.mxu0
  %v191 = vpop.f32.mrf.mxu0
  %v192 = vadd.f32 0.0, %v191
  %v193 = vpop.f32.mrf.mxu0
  %194 = vmatprep.mubr.bf16.mxu0 0
  %195 = vmatmul.mubr.bf16.gmra.mxu0 %v69
  %v196 = vpop.f32.mrf.mxu0
  %v197 = vadd.f32 0.0, %v196
  %v198 = vpop.f32.mrf.mxu0
  %v199 = vpop.f32.mrf.mxu0
  %v200 = vadd.f32 0.0, %v199
  %v201 = vpop.f32.mrf.mxu0
  %202 = vmatprep.mubr.bf16.mxu0 0
  %203 = vmatmul.mubr.bf16.gmra.mxu0 %v70
  %v204 = vpop.f32.mrf.mxu0
  %v205 = vadd.f32 0.0, %v204
  %v206 = vpop.f32.mrf.mxu0
  %v207 = vpop.f32.mrf.mxu0
  %v208 = vadd.f32 0.0, %v207
  %v209 = vpop.f32.mrf.mxu0
  %210 = vmatprep.mubr.bf16.mxu0 0
  %211 = vmatmul.mubr.bf16.gmra.mxu0 %v71
  %v212 = vpop.f32.mrf.mxu0
  %v213 = vadd.f32 0.0, %v212
  %v214 = vpop.f32.mrf.mxu0
  %v215 = vpop.f32.mrf.mxu0
  %v216 = vadd.f32 0.0, %v215
  %v217 = vpop.f32.mrf.mxu0
  %218 = vmatprep.mubr.bf16.mxu0 0
  %219 = vmatmul.mubr.bf16.gmra.mxu0 %v72
  %v220 = vpop.f32.mrf.mxu0
  %v221 = vadd.f32 0.0, %v220
  %v222 = vpop.f32.mrf.mxu0
  %v223 = vpop.f32.mrf.mxu0
  %v224 = vadd.f32 0.0, %v223
  %v225 = vpop.f32.mrf.mxu0
  %226 = vmatprep.mubr.bf16.mxu0 0
  %227 = vmatmul.mubr.bf16.gmra.mxu0 %v73
  %v228 = vpop.f32.mrf.mxu0
  %v229 = vadd.f32 0.0, %v228
  %v230 = vpop.f32.mrf.mxu0
  %v231 = vpop.f32.mrf.mxu0
  %v232 = vadd.f32 0.0, %v231
  %v233 = vpop.f32.mrf.mxu0
  %234 = vdwg.mxu0
  %v235 = vld [vmem:[%s0] sm:$0xf]
  %v236 = vld [vmem:[%s0 + $0x4] sm:$0xf]
  %v237 = vld [vmem:[%s0 + $0x8] sm:$0xf]
  %v238 = vld [vmem:[%s0 + $0xc] sm:$0xf]
  %v239 = vld [vmem:[%s0 + $0x10] sm:$0xf]
  %v240 = vld [vmem:[%s0 + $0x14] sm:$0xf]
  %v241 = vld [vmem:[%s0 + $0x18] sm:$0xf]
  %v242 = vld [vmem:[%s0 + $0x1c] sm:$0xf]
  %v243 = vld [vmem:[%s0 + $0x20] sm:$0xf]
  %v244 = vld [vmem:[%s0 + $0x24] sm:$0xf]
  %v245 = vld [vmem:[%s0 + $0x28] sm:$0xf]
  %v246 = vld [vmem:[%s0 + $0x2c] sm:$0xf]
  %v247 = vld [vmem:[%s0 + $0x30] sm:$0xf]
  %v248 = vld [vmem:[%s0 + $0x34] sm:$0xf]
  %v249 = vld [vmem:[%s0 + $0x38] sm:$0xf]
  %v250 = vld [vmem:[%s0 + $0x3c] sm:$0xf]
  %v251 = vpack.c.bf16 %v176, %v173
  %v252 = vpack.c.bf16 %v184, %v181
  %v253 = vpack.c.bf16 %v192, %v189
  %v254 = vpack.c.bf16 %v200, %v197
  %v255 = vpack.c.bf16 %v208, %v205
  %v256 = vpack.c.bf16 %v216, %v213
  %v257 = vpack.c.bf16 %v224, %v221
  %v258 = vpack.c.bf16 %v232, %v229
  %v259 = vld [vmem:[%s3] sm:$0x1]
  %v261 = vlaneseq
  %v262 = vshrl.u32 %v261, 7
  %v263 = vsub.s32 0, %v262
  %v264 = vrot.slane %v259, %v263
  %v282 = vunpack.c.l.b16 %v235
  %v283 = vunpack.c.l.b16 %v236
  %v284 = vunpack.c.l.b16 %v237
  %v285 = vunpack.c.l.b16 %v238
  %v286 = vunpack.c.l.b16 %v239
  %v287 = vunpack.c.l.b16 %v240
  %v288 = vunpack.c.l.b16 %v241
  %v289 = vunpack.c.l.b16 %v242
  %v290 = vunpack.c.l.b16 %v243
  %v291 = vunpack.c.l.b16 %v244
  %v292 = vunpack.c.l.b16 %v245
  %v293 = vunpack.c.l.b16 %v246
  %v294 = vunpack.c.l.b16 %v247
  %v295 = vunpack.c.l.b16 %v248
  %v296 = vunpack.c.l.b16 %v249
  %v297 = vunpack.c.l.b16 %v250
  %v298 = vpack.c.b16 %v283, %v282
  %v299 = vpack.c.b16 %v285, %v284
  %v300 = vpack.c.b16 %v287, %v286
  %v301 = vpack.c.b16 %v289, %v288
  %v302 = vpack.c.b16 %v291, %v290
  %v303 = vpack.c.b16 %v293, %v292
  %v304 = vpack.c.b16 %v295, %v294
  %v305 = vpack.c.b16 %v297, %v296
  %314 = vmatprep.subr.bf16.mxu0 0
  %315 = vmatpush1.bf16.msra.mxu0 %v258
  %316 = vmatprep.subr.bf16.mxu0 0
  %317 = vmatpush1.bf16.msra.mxu0 %v257
  %318 = vmatprep.subr.bf16.mxu0 0
  %319 = vmatpush1.bf16.msra.mxu0 %v256
  %320 = vmatprep.subr.bf16.mxu0 0
  %321 = vmatpush1.bf16.msra.mxu0 %v255
  %322 = vmatprep.subr.bf16.mxu0 0
  %323 = vmatpush1.bf16.msra.mxu0 %v254
  %324 = vmatprep.subr.bf16.mxu0 0
  %325 = vmatpush1.bf16.msra.mxu0 %v253
  %326 = vmatprep.subr.bf16.mxu0 0
  %327 = vmatpush1.bf16.msra.mxu0 %v252
  %328 = vmatprep.subr.bf16.mxu0 0
  %329 = vmatpush1.bf16.msra.mxu0 %v251
  %330 = vmatprep.subr.bf16.mxu0 0
  %331 = vmatpush2.bf16.msra.mxu0 0
  %332 = vmatprep.subr.bf16.mxu0 0
  %333 = vmatpush2.bf16.msra.mxu0 0
  %334 = vmatprep.subr.bf16.mxu0 0
  %335 = vmatpush2.bf16.msra.mxu0 0
  %336 = vmatprep.subr.bf16.mxu0 0
  %337 = vmatpush2.bf16.msra.mxu0 0
  %338 = vmatprep.subr.bf16.mxu0 0
  %339 = vmatpush2.bf16.msra.mxu0 0
  %340 = vmatprep.subr.bf16.mxu0 0
  %341 = vmatpush2.bf16.msra.mxu0 0
  %342 = vmatprep.subr.bf16.mxu0 0
  %343 = vmatpush2.bf16.msra.mxu0 0
  %344 = vmatprep.subr.bf16.mxu0 0
  %345 = vmatpush2.bf16.msra.mxu0 0
  %346 = vmatprep.mubr.bf16.mxu0 0
  %347 = vmatmul.mubr.bf16.gmra.mxu0 %v298
  %v348 = vpop.f32.mrf.mxu0
  %v349 = vadd.f32 %v264, %v348
  %v350 = vpop.f32.mrf.mxu0
  %v351 = vpop.f32.mrf.mxu0
  %v352 = vadd.f32 %v264, %v351
  %v353 = vpop.f32.mrf.mxu0
  %354 = vmatprep.mubr.bf16.mxu0 0
  %355 = vmatmul.mubr.bf16.gmra.mxu0 %v299
  %v356 = vpop.f32.mrf.mxu0
  %v357 = vadd.f32 %v264, %v356
  %v358 = vpop.f32.mrf.mxu0
  %v359 = vpop.f32.mrf.mxu0
  %v360 = vadd.f32 %v264, %v359
  %v361 = vpop.f32.mrf.mxu0
  %362 = vmatprep.mubr.bf16.mxu0 0
  %363 = vmatmul.mubr.bf16.gmra.mxu0 %v300
  %v364 = vpop.f32.mrf.mxu0
  %v365 = vadd.f32 %v264, %v364
  %v366 = vpop.f32.mrf.mxu0
  %v367 = vpop.f32.mrf.mxu0
  %v368 = vadd.f32 %v264, %v367
  %v369 = vpop.f32.mrf.mxu0
  %370 = vmatprep.mubr.bf16.mxu0 0
  %371 = vmatmul.mubr.bf16.gmra.mxu0 %v301
  %v372 = vpop.f32.mrf.mxu0
  %v373 = vadd.f32 %v264, %v372
  %v374 = vpop.f32.mrf.mxu0
  %v375 = vpop.f32.mrf.mxu0
  %v376 = vadd.f32 %v264, %v375
  %v377 = vpop.f32.mrf.mxu0
  %378 = vmatprep.mubr.bf16.mxu0 0
  %379 = vmatmul.mubr.bf16.gmra.mxu0 %v302
  %v380 = vpop.f32.mrf.mxu0
  %v381 = vadd.f32 %v264, %v380
  %v382 = vpop.f32.mrf.mxu0
  %v383 = vpop.f32.mrf.mxu0
  %v384 = vadd.f32 %v264, %v383
  %v385 = vpop.f32.mrf.mxu0
  %386 = vmatprep.mubr.bf16.mxu0 0
  %387 = vmatmul.mubr.bf16.gmra.mxu0 %v303
  %v388 = vpop.f32.mrf.mxu0
  %v389 = vadd.f32 %v264, %v388
  %v390 = vpop.f32.mrf.mxu0
  %v391 = vpop.f32.mrf.mxu0
  %v392 = vadd.f32 %v264, %v391
  %v393 = vpop.f32.mrf.mxu0
  %394 = vmatprep.mubr.bf16.mxu0 0
  %395 = vmatmul.mubr.bf16.gmra.mxu0 %v304
  %v396 = vpop.f32.mrf.mxu0
  %v397 = vadd.f32 %v264, %v396
  %v398 = vpop.f32.mrf.mxu0
  %v399 = vpop.f32.mrf.mxu0
  %v400 = vadd.f32 %v264, %v399
  %v401 = vpop.f32.mrf.mxu0
  %402 = vmatprep.mubr.bf16.mxu0 0
  %403 = vmatmul.mubr.bf16.gmra.mxu0 %v305
  %v404 = vpop.f32.mrf.mxu0
  %v405 = vadd.f32 %v264, %v404
  %v406 = vpop.f32.mrf.mxu0
  %v407 = vpop.f32.mrf.mxu0
  %v408 = vadd.f32 %v264, %v407
  %v409 = vpop.f32.mrf.mxu0
  %410 = vdwg.mxu0
  %v411 = vmul.f32 %v349, 0.5
  %v412 = vmul.f32 %v352, 0.5
  %v413 = vmul.f32 %v357, 0.5
  %v414 = vmul.f32 %v360, 0.5
  %v415 = vmul.f32 %v365, 0.5
  %v416 = vmul.f32 %v368, 0.5
  %v417 = vmul.f32 %v373, 0.5
  %v418 = vmul.f32 %v376, 0.5
  %v419 = vmul.f32 %v381, 0.5
  %v420 = vmul.f32 %v384, 0.5
  %v421 = vmul.f32 %v389, 0.5
  %v422 = vmul.f32 %v392, 0.5
  %v423 = vmul.f32 %v397, 0.5
  %v424 = vmul.f32 %v400, 0.5
  %v425 = vmul.f32 %v405, 0.5
  %v426 = vmul.f32 %v408, 0.5
  %v427 = vmul.f32 %v349, 0.70710677
  %v428 = vmul.f32 %v352, 0.70710677
  %v429 = vmul.f32 %v357, 0.70710677
  %v430 = vmul.f32 %v360, 0.70710677
  %v431 = vmul.f32 %v365, 0.70710677
  %v432 = vmul.f32 %v368, 0.70710677
  %v433 = vmul.f32 %v373, 0.70710677
  %v434 = vmul.f32 %v376, 0.70710677
  %v435 = vmul.f32 %v381, 0.70710677
  %v436 = vmul.f32 %v384, 0.70710677
  %v437 = vmul.f32 %v389, 0.70710677
  %v438 = vmul.f32 %v392, 0.70710677
  %v439 = vmul.f32 %v397, 0.70710677
  %v440 = vmul.f32 %v400, 0.70710677
  %v441 = vmul.f32 %v405, 0.70710677
  %v442 = vmul.f32 %v408, 0.70710677
  %v443 = verf.f32.pop %v427
  %v444 = verf.f32.pop %v428
  %v445 = verf.f32.pop %v429
  %v446 = verf.f32.pop %v430
  %v447 = verf.f32.pop %v431
  %v448 = verf.f32.pop %v432
  %v449 = verf.f32.pop %v433
  %v450 = verf.f32.pop %v434
  %v451 = verf.f32.pop %v435
  %v452 = verf.f32.pop %v436
  %v453 = verf.f32.pop %v437
  %v454 = verf.f32.pop %v438
  %v455 = verf.f32.pop %v439
  %v456 = verf.f32.pop %v440
  %v457 = verf.f32.pop %v441
  %v458 = verf.f32.pop %v442
  %v459 = vadd.f32 %v443, 1.0
  %v460 = vadd.f32 %v444, 1.0
  %v461 = vadd.f32 %v445, 1.0
  %v462 = vadd.f32 %v446, 1.0
  %v463 = vadd.f32 %v447, 1.0
  %v464 = vadd.f32 %v448, 1.0
  %v465 = vadd.f32 %v449, 1.0
  %v466 = vadd.f32 %v450, 1.0
  %v467 = vadd.f32 %v451, 1.0
  %v468 = vadd.f32 %v452, 1.0
  %v469 = vadd.f32 %v453, 1.0
  %v470 = vadd.f32 %v454, 1.0
  %v471 = vadd.f32 %v455, 1.0
  %v472 = vadd.f32 %v456, 1.0
  %v473 = vadd.f32 %v457, 1.0
  %v474 = vadd.f32 %v458, 1.0
  %v475 = vmul.f32 %v411, %v459
  %v476 = vmul.f32 %v412, %v460
  %v477 = vmul.f32 %v413, %v461
  %v478 = vmul.f32 %v414, %v462
  %v479 = vmul.f32 %v415, %v463
  %v480 = vmul.f32 %v416, %v464
  %v481 = vmul.f32 %v417, %v465
  %v482 = vmul.f32 %v418, %v466
  %v483 = vmul.f32 %v419, %v467
  %v484 = vmul.f32 %v420, %v468
  %v485 = vmul.f32 %v421, %v469
  %v486 = vmul.f32 %v422, %v470
  %v487 = vmul.f32 %v423, %v471
  %v488 = vmul.f32 %v424, %v472
  %v489 = vmul.f32 %v425, %v473
  %v490 = vmul.f32 %v426, %v474
  %491 = vst [vmem:[#allocation2] sm:$0xff] %v475
  %492 = vst [vmem:[#allocation2 + $0x8] sm:$0xff] %v476
  %493 = vst [vmem:[#allocation2 + $0x10] sm:$0xff] %v477
  %494 = vst [vmem:[#allocation2 + $0x18] sm:$0xff] %v478
  %495 = vst [vmem:[#allocation2 + $0x20] sm:$0xff] %v479
  %496 = vst [vmem:[#allocation2 + $0x28] sm:$0xff] %v480
  %497 = vst [vmem:[#allocation2 + $0x30] sm:$0xff] %v481
  %498 = vst [vmem:[#allocation2 + $0x38] sm:$0xff] %v482
  %499 = vst [vmem:[#allocation2 + $0x40] sm:$0xff] %v483
  %500 = vst [vmem:[#allocation2 + $0x48] sm:$0xff] %v484
  %501 = vst [vmem:[#allocation2 + $0x50] sm:$0xff] %v485
  %502 = vst [vmem:[#allocation2 + $0x58] sm:$0xff] %v486
  %503 = vst [vmem:[#allocation2 + $0x60] sm:$0xff] %v487
  %504 = vst [vmem:[#allocation2 + $0x68] sm:$0xff] %v488
  %505 = vst [vmem:[#allocation2 + $0x70] sm:$0xff] %v489
  %506 = vst [vmem:[#allocation2 + $0x78] sm:$0xff] %v490
  %v507 = vld [vmem:[#allocation2] sm:$0xff]
  %v508 = vld [vmem:[#allocation2 + $0x8] sm:$0xff]
  %v509 = vld [vmem:[#allocation2 + $0x10] sm:$0xff]
  %v510 = vld [vmem:[#allocation2 + $0x18] sm:$0xff]
  %v511 = vld [vmem:[#allocation2 + $0x20] sm:$0xff]
  %v512 = vld [vmem:[#allocation2 + $0x28] sm:$0xff]
  %v513 = vld [vmem:[#allocation2 + $0x30] sm:$0xff]
  %v514 = vld [vmem:[#allocation2 + $0x38] sm:$0xff]
  %v515 = vld [vmem:[#allocation2 + $0x40] sm:$0xff]
  %v516 = vld [vmem:[#allocation2 + $0x48] sm:$0xff]
  %v517 = vld [vmem:[#allocation2 + $0x50] sm:$0xff]
  %v518 = vld [vmem:[#allocation2 + $0x58] sm:$0xff]
  %v519 = vld [vmem:[#allocation2 + $0x60] sm:$0xff]
  %v520 = vld [vmem:[#allocation2 + $0x68] sm:$0xff]
  %v521 = vld [vmem:[#allocation2 + $0x70] sm:$0xff]
  %v522 = vld [vmem:[#allocation2 + $0x78] sm:$0xff]
  %v523 = vpack.c.bf16 %v508, %v507
  %v524 = vpack.c.bf16 %v510, %v509
  %v525 = vpack.c.bf16 %v512, %v511
  %v526 = vpack.c.bf16 %v514, %v513
  %v527 = vpack.c.bf16 %v516, %v515
  %v528 = vpack.c.bf16 %v518, %v517
  %v529 = vpack.c.bf16 %v520, %v519
  %v530 = vpack.c.bf16 %v522, %v521
  %s531 = scalar_lea.vmem %s2, 64
  %v532 = vld [vmem:[%s531] sm:$0xf]
  %v533 = vld [vmem:[%s531 + $0x4] sm:$0xf]
  %v534 = vld [vmem:[%s531 + $0x8] sm:$0xf]
  %v535 = vld [vmem:[%s531 + $0xc] sm:$0xf]
  %v536 = vld [vmem:[%s531 + $0x10] sm:$0xf]
  %v537 = vld [vmem:[%s531 + $0x14] sm:$0xf]
  %v538 = vld [vmem:[%s531 + $0x18] sm:$0xf]
  %v539 = vld [vmem:[%s531 + $0x1c] sm:$0xf]
  %v540 = vld [vmem:[%s531 + $0x20] sm:$0xf]
  %v541 = vld [vmem:[%s531 + $0x24] sm:$0xf]
  %v542 = vld [vmem:[%s531 + $0x28] sm:$0xf]
  %v543 = vld [vmem:[%s531 + $0x2c] sm:$0xf]
  %v544 = vld [vmem:[%s531 + $0x30] sm:$0xf]
  %v545 = vld [vmem:[%s531 + $0x34] sm:$0xf]
  %v546 = vld [vmem:[%s531 + $0x38] sm:$0xf]
  %v547 = vld [vmem:[%s531 + $0x3c] sm:$0xf]
  %v564 = vunpack.c.l.b16 %v532
  %v565 = vunpack.c.l.b16 %v533
  %v566 = vunpack.c.l.b16 %v534
  %v567 = vunpack.c.l.b16 %v535
  %v568 = vunpack.c.l.b16 %v536
  %v569 = vunpack.c.l.b16 %v537
  %v570 = vunpack.c.l.b16 %v538
  %v571 = vunpack.c.l.b16 %v539
  %v572 = vunpack.c.l.b16 %v540
  %v573 = vunpack.c.l.b16 %v541
  %v574 = vunpack.c.l.b16 %v542
  %v575 = vunpack.c.l.b16 %v543
  %v576 = vunpack.c.l.b16 %v544
  %v577 = vunpack.c.l.b16 %v545
  %v578 = vunpack.c.l.b16 %v546
  %v579 = vunpack.c.l.b16 %v547
  %v580 = vpack.c.b16 %v565, %v564
  %v581 = vpack.c.b16 %v567, %v566
  %v582 = vpack.c.b16 %v569, %v568
  %v583 = vpack.c.b16 %v571, %v570
  %v584 = vpack.c.b16 %v573, %v572
  %v585 = vpack.c.b16 %v575, %v574
  %v586 = vpack.c.b16 %v577, %v576
  %v587 = vpack.c.b16 %v579, %v578
  %596 = vmatprep.subr.bf16.mxu0 0
  %597 = vmatpush1.bf16.msra.mxu0 %v587
  %598 = vmatprep.subr.bf16.mxu0 0
  %599 = vmatpush1.bf16.msra.mxu0 %v586
  %600 = vmatprep.subr.bf16.mxu0 0
  %601 = vmatpush1.bf16.msra.mxu0 %v585
  %602 = vmatprep.subr.bf16.mxu0 0
  %603 = vmatpush1.bf16.msra.mxu0 %v584
  %604 = vmatprep.subr.bf16.mxu0 0
  %605 = vmatpush1.bf16.msra.mxu0 %v583
  %606 = vmatprep.subr.bf16.mxu0 0
  %607 = vmatpush1.bf16.msra.mxu0 %v582
  %608 = vmatprep.subr.bf16.mxu0 0
  %609 = vmatpush1.bf16.msra.mxu0 %v581
  %610 = vmatprep.subr.bf16.mxu0 0
  %611 = vmatpush1.bf16.msra.mxu0 %v580
  %612 = vmatprep.subr.bf16.mxu0 0
  %613 = vmatpush2.bf16.msra.mxu0 0
  %614 = vmatprep.subr.bf16.mxu0 0
  %615 = vmatpush2.bf16.msra.mxu0 0
  %616 = vmatprep.subr.bf16.mxu0 0
  %617 = vmatpush2.bf16.msra.mxu0 0
  %618 = vmatprep.subr.bf16.mxu0 0
  %619 = vmatpush2.bf16.msra.mxu0 0
  %620 = vmatprep.subr.bf16.mxu0 0
  %621 = vmatpush2.bf16.msra.mxu0 0
  %622 = vmatprep.subr.bf16.mxu0 0
  %623 = vmatpush2.bf16.msra.mxu0 0
  %624 = vmatprep.subr.bf16.mxu0 0
  %625 = vmatpush2.bf16.msra.mxu0 0
  %626 = vmatprep.subr.bf16.mxu0 0
  %627 = vmatpush2.bf16.msra.mxu0 0
  %628 = vmatprep.mubr.bf16.mxu0 0
  %629 = vmatmul.mubr.bf16.gmra.mxu0 %v523
  %v630 = vpop.f32.mrf.mxu0
  %v631 = vadd.f32 0.0, %v630
  %v632 = vpop.f32.mrf.mxu0
  %v633 = vpop.f32.mrf.mxu0
  %v634 = vadd.f32 0.0, %v633
  %v635 = vpop.f32.mrf.mxu0
  %636 = vmatprep.mubr.bf16.mxu0 0
  %637 = vmatmul.mubr.bf16.gmra.mxu0 %v524
  %v638 = vpop.f32.mrf.mxu0
  %v639 = vadd.f32 0.0, %v638
  %v640 = vpop.f32.mrf.mxu0
  %v641 = vpop.f32.mrf.mxu0
  %v642 = vadd.f32 0.0, %v641
  %v643 = vpop.f32.mrf.mxu0
  %644 = vmatprep.mubr.bf16.mxu0 0
  %645 = vmatmul.mubr.bf16.gmra.mxu0 %v525
  %v646 = vpop.f32.mrf.mxu0
  %v647 = vadd.f32 0.0, %v646
  %v648 = vpop.f32.mrf.mxu0
  %v649 = vpop.f32.mrf.mxu0
  %v650 = vadd.f32 0.0, %v649
  %v651 = vpop.f32.mrf.mxu0
  %652 = vmatprep.mubr.bf16.mxu0 0
  %653 = vmatmul.mubr.bf16.gmra.mxu0 %v526
  %v654 = vpop.f32.mrf.mxu0
  %v655 = vadd.f32 0.0, %v654
  %v656 = vpop.f32.mrf.mxu0
  %v657 = vpop.f32.mrf.mxu0
  %v658 = vadd.f32 0.0, %v657
  %v659 = vpop.f32.mrf.mxu0
  %660 = vmatprep.mubr.bf16.mxu0 0
  %661 = vmatmul.mubr.bf16.gmra.mxu0 %v527
  %v662 = vpop.f32.mrf.mxu0
  %v663 = vadd.f32 0.0, %v662
  %v664 = vpop.f32.mrf.mxu0
  %v665 = vpop.f32.mrf.mxu0
  %v666 = vadd.f32 0.0, %v665
  %v667 = vpop.f32.mrf.mxu0
  %668 = vmatprep.mubr.bf16.mxu0 0
  %669 = vmatmul.mubr.bf16.gmra.mxu0 %v528
  %v670 = vpop.f32.mrf.mxu0
  %v671 = vadd.f32 0.0, %v670
  %v672 = vpop.f32.mrf.mxu0
  %v673 = vpop.f32.mrf.mxu0
  %v674 = vadd.f32 0.0, %v673
  %v675 = vpop.f32.mrf.mxu0
  %676 = vmatprep.mubr.bf16.mxu0 0
  %677 = vmatmul.mubr.bf16.gmra.mxu0 %v529
  %v678 = vpop.f32.mrf.mxu0
  %v679 = vadd.f32 0.0, %v678
  %v680 = vpop.f32.mrf.mxu0
  %v681 = vpop.f32.mrf.mxu0
  %v682 = vadd.f32 0.0, %v681
  %v683 = vpop.f32.mrf.mxu0
  %684 = vmatprep.mubr.bf16.mxu0 0
  %685 = vmatmul.mubr.bf16.gmra.mxu0 %v530
  %v686 = vpop.f32.mrf.mxu0
  %v687 = vadd.f32 0.0, %v686
  %v688 = vpop.f32.mrf.mxu0
  %v689 = vpop.f32.mrf.mxu0
  %v690 = vadd.f32 0.0, %v689
  %v691 = vpop.f32.mrf.mxu0
  %692 = vdwg.mxu0
  %v693 = vld [vmem:[%s0] sm:$0xf]
  %v694 = vld [vmem:[%s0 + $0x4] sm:$0xf]
  %v695 = vld [vmem:[%s0 + $0x8] sm:$0xf]
  %v696 = vld [vmem:[%s0 + $0xc] sm:$0xf]
  %v697 = vld [vmem:[%s0 + $0x10] sm:$0xf]
  %v698 = vld [vmem:[%s0 + $0x14] sm:$0xf]
  %v699 = vld [vmem:[%s0 + $0x18] sm:$0xf]
  %v700 = vld [vmem:[%s0 + $0x1c] sm:$0xf]
  %v701 = vld [vmem:[%s0 + $0x20] sm:$0xf]
  %v702 = vld [vmem:[%s0 + $0x24] sm:$0xf]
  %v703 = vld [vmem:[%s0 + $0x28] sm:$0xf]
  %v704 = vld [vmem:[%s0 + $0x2c] sm:$0xf]
  %v705 = vld [vmem:[%s0 + $0x30] sm:$0xf]
  %v706 = vld [vmem:[%s0 + $0x34] sm:$0xf]
  %v707 = vld [vmem:[%s0 + $0x38] sm:$0xf]
  %v708 = vld [vmem:[%s0 + $0x3c] sm:$0xf]
  %v709 = vpack.c.bf16 %v634, %v631
  %v710 = vpack.c.bf16 %v642, %v639
  %v711 = vpack.c.bf16 %v650, %v647
  %v712 = vpack.c.bf16 %v658, %v655
  %v713 = vpack.c.bf16 %v666, %v663
  %v714 = vpack.c.bf16 %v674, %v671
  %v715 = vpack.c.bf16 %v682, %v679
  %v716 = vpack.c.bf16 %v690, %v687
  %s717 = scalar_lea.vmem %s3, 1
  %v718 = vld [vmem:[%s717] sm:$0x1]
  %v720 = vlaneseq
  %v721 = vshrl.u32 %v720, 7
  %v722 = vsub.s32 0, %v721
  %v723 = vrot.slane %v718, %v722
  %v741 = vunpack.c.l.b16 %v693
  %v742 = vunpack.c.l.b16 %v694
  %v743 = vunpack.c.l.b16 %v695
  %v744 = vunpack.c.l.b16 %v696
  %v745 = vunpack.c.l.b16 %v697
  %v746 = vunpack.c.l.b16 %v698
  %v747 = vunpack.c.l.b16 %v699
  %v748 = vunpack.c.l.b16 %v700
  %v749 = vunpack.c.l.b16 %v701
  %v750 = vunpack.c.l.b16 %v702
  %v751 = vunpack.c.l.b16 %v703
  %v752 = vunpack.c.l.b16 %v704
  %v753 = vunpack.c.l.b16 %v705
  %v754 = vunpack.c.l.b16 %v706
  %v755 = vunpack.c.l.b16 %v707
  %v756 = vunpack.c.l.b16 %v708
  %v757 = vpack.c.b16 %v742, %v741
  %v758 = vpack.c.b16 %v744, %v743
  %v759 = vpack.c.b16 %v746, %v745
  %v760 = vpack.c.b16 %v748, %v747
  %v761 = vpack.c.b16 %v750, %v749
  %v762 = vpack.c.b16 %v752, %v751
  %v763 = vpack.c.b16 %v754, %v753
  %v764 = vpack.c.b16 %v756, %v755
  %773 = vmatprep.subr.bf16.mxu0 0
  %774 = vmatpush1.bf16.msra.mxu0 %v716
  %775 = vmatprep.subr.bf16.mxu0 0
  %776 = vmatpush1.bf16.msra.mxu0 %v715
  %777 = vmatprep.subr.bf16.mxu0 0
  %778 = vmatpush1.bf16.msra.mxu0 %v714
  %779 = vmatprep.subr.bf16.mxu0 0
  %780 = vmatpush1.bf16.msra.mxu0 %v713
  %781 = vmatprep.subr.bf16.mxu0 0
  %782 = vmatpush1.bf16.msra.mxu0 %v712
  %783 = vmatprep.subr.bf16.mxu0 0
  %784 = vmatpush1.bf16.msra.mxu0 %v711
  %785 = vmatprep.subr.bf16.mxu0 0
  %786 = vmatpush1.bf16.msra.mxu0 %v710
  %787 = vmatprep.subr.bf16.mxu0 0
  %788 = vmatpush1.bf16.msra.mxu0 %v709
  %789 = vmatprep.subr.bf16.mxu0 0
  %790 = vmatpush2.bf16.msra.mxu0 0
  %791 = vmatprep.subr.bf16.mxu0 0
  %792 = vmatpush2.bf16.msra.mxu0 0
  %793 = vmatprep.subr.bf16.mxu0 0
  %794 = vmatpush2.bf16.msra.mxu0 0
  %795 = vmatprep.subr.bf16.mxu0 0
  %796 = vmatpush2.bf16.msra.mxu0 0
  %797 = vmatprep.subr.bf16.mxu0 0
  %798 = vmatpush2.bf16.msra.mxu0 0
  %799 = vmatprep.subr.bf16.mxu0 0
  %800 = vmatpush2.bf16.msra.mxu0 0
  %801 = vmatprep.subr.bf16.mxu0 0
  %802 = vmatpush2.bf16.msra.mxu0 0
  %803 = vmatprep.subr.bf16.mxu0 0
  %804 = vmatpush2.bf16.msra.mxu0 0
  %805 = vmatprep.mubr.bf16.mxu0 0
  %806 = vmatmul.mubr.bf16.gmra.mxu0 %v757
  %v807 = vpop.f32.mrf.mxu0
  %v808 = vadd.f32 %v723, %v807
  %v809 = vpop.f32.mrf.mxu0
  %v810 = vpop.f32.mrf.mxu0
  %v811 = vadd.f32 %v723, %v810
  %v812 = vpop.f32.mrf.mxu0
  %813 = vmatprep.mubr.bf16.mxu0 0
  %814 = vmatmul.mubr.bf16.gmra.mxu0 %v758
  %v815 = vpop.f32.mrf.mxu0
  %v816 = vadd.f32 %v723, %v815
  %v817 = vpop.f32.mrf.mxu0
  %v818 = vpop.f32.mrf.mxu0
  %v819 = vadd.f32 %v723, %v818
  %v820 = vpop.f32.mrf.mxu0
  %821 = vmatprep.mubr.bf16.mxu0 0
  %822 = vmatmul.mubr.bf16.gmra.mxu0 %v759
  %v823 = vpop.f32.mrf.mxu0
  %v824 = vadd.f32 %v723, %v823
  %v825 = vpop.f32.mrf.mxu0
  %v826 = vpop.f32.mrf.mxu0
  %v827 = vadd.f32 %v723, %v826
  %v828 = vpop.f32.mrf.mxu0
  %829 = vmatprep.mubr.bf16.mxu0 0
  %830 = vmatmul.mubr.bf16.gmra.mxu0 %v760
  %v831 = vpop.f32.mrf.mxu0
  %v832 = vadd.f32 %v723, %v831
  %v833 = vpop.f32.mrf.mxu0
  %v834 = vpop.f32.mrf.mxu0
  %v835 = vadd.f32 %v723, %v834
  %v836 = vpop.f32.mrf.mxu0
  %837 = vmatprep.mubr.bf16.mxu0 0
  %838 = vmatmul.mubr.bf16.gmra.mxu0 %v761
  %v839 = vpop.f32.mrf.mxu0
  %v840 = vadd.f32 %v723, %v839
  %v841 = vpop.f32.mrf.mxu0
  %v842 = vpop.f32.mrf.mxu0
  %v843 = vadd.f32 %v723, %v842
  %v844 = vpop.f32.mrf.mxu0
  %845 = vmatprep.mubr.bf16.mxu0 0
  %846 = vmatmul.mubr.bf16.gmra.mxu0 %v762
  %v847 = vpop.f32.mrf.mxu0
  %v848 = vadd.f32 %v723, %v847
  %v849 = vpop.f32.mrf.mxu0
  %v850 = vpop.f32.mrf.mxu0
  %v851 = vadd.f32 %v723, %v850
  %v852 = vpop.f32.mrf.mxu0
  %853 = vmatprep.mubr.bf16.mxu0 0
  %854 = vmatmul.mubr.bf16.gmra.mxu0 %v763
  %v855 = vpop.f32.mrf.mxu0
  %v856 = vadd.f32 %v723, %v855
  %v857 = vpop.f32.mrf.mxu0
  %v858 = vpop.f32.mrf.mxu0
  %v859 = vadd.f32 %v723, %v858
  %v860 = vpop.f32.mrf.mxu0
  %861 = vmatprep.mubr.bf16.mxu0 0
  %862 = vmatmul.mubr.bf16.gmra.mxu0 %v764
  %v863 = vpop.f32.mrf.mxu0
  %v864 = vadd.f32 %v723, %v863
  %v865 = vpop.f32.mrf.mxu0
  %v866 = vpop.f32.mrf.mxu0
  %v867 = vadd.f32 %v723, %v866
  %v868 = vpop.f32.mrf.mxu0
  %869 = vdwg.mxu0
  %v870 = vmul.f32 %v808, 0.5
  %v871 = vmul.f32 %v811, 0.5
  %v872 = vmul.f32 %v816, 0.5
  %v873 = vmul.f32 %v819, 0.5
  %v874 = vmul.f32 %v824, 0.5
  %v875 = vmul.f32 %v827, 0.5
  %v876 = vmul.f32 %v832, 0.5
  %v877 = vmul.f32 %v835, 0.5
  %v878 = vmul.f32 %v840, 0.5
  %v879 = vmul.f32 %v843, 0.5
  %v880 = vmul.f32 %v848, 0.5
  %v881 = vmul.f32 %v851, 0.5
  %v882 = vmul.f32 %v856, 0.5
  %v883 = vmul.f32 %v859, 0.5
  %v884 = vmul.f32 %v864, 0.5
  %v885 = vmul.f32 %v867, 0.5
  %v886 = vmul.f32 %v808, 0.70710677
  %v887 = vmul.f32 %v811, 0.70710677
  %v888 = vmul.f32 %v816, 0.70710677
  %v889 = vmul.f32 %v819, 0.70710677
  %v890 = vmul.f32 %v824, 0.70710677
  %v891 = vmul.f32 %v827, 0.70710677
  %v892 = vmul.f32 %v832, 0.70710677
  %v893 = vmul.f32 %v835, 0.70710677
  %v894 = vmul.f32 %v840, 0.70710677
  %v895 = vmul.f32 %v843, 0.70710677
  %v896 = vmul.f32 %v848, 0.70710677
  %v897 = vmul.f32 %v851, 0.70710677
  %v898 = vmul.f32 %v856, 0.70710677
  %v899 = vmul.f32 %v859, 0.70710677
  %v900 = vmul.f32 %v864, 0.70710677
  %v901 = vmul.f32 %v867, 0.70710677
  %v902 = verf.f32.pop %v886
  %v903 = verf.f32.pop %v887
  %v904 = verf.f32.pop %v888
  %v905 = verf.f32.pop %v889
  %v906 = verf.f32.pop %v890
  %v907 = verf.f32.pop %v891
  %v908 = verf.f32.pop %v892
  %v909 = verf.f32.pop %v893
  %v910 = verf.f32.pop %v894
  %v911 = verf.f32.pop %v895
  %v912 = verf.f32.pop %v896
  %v913 = verf.f32.pop %v897
  %v914 = verf.f32.pop %v898
  %v915 = verf.f32.pop %v899
  %v916 = verf.f32.pop %v900
  %v917 = verf.f32.pop %v901
  %v918 = vadd.f32 %v902, 1.0
  %v919 = vadd.f32 %v903, 1.0
  %v920 = vadd.f32 %v904, 1.0
  %v921 = vadd.f32 %v905, 1.0
  %v922 = vadd.f32 %v906, 1.0
  %v923 = vadd.f32 %v907, 1.0
  %v924 = vadd.f32 %v908, 1.0
  %v925 = vadd.f32 %v909, 1.0
  %v926 = vadd.f32 %v910, 1.0
  %v927 = vadd.f32 %v911, 1.0
  %v928 = vadd.f32 %v912, 1.0
  %v929 = vadd.f32 %v913, 1.0
  %v930 = vadd.f32 %v914, 1.0
  %v931 = vadd.f32 %v915, 1.0
  %v932 = vadd.f32 %v916, 1.0
  %v933 = vadd.f32 %v917, 1.0
  %v934 = vmul.f32 %v870, %v918
  %v935 = vmul.f32 %v871, %v919
  %v936 = vmul.f32 %v872, %v920
  %v937 = vmul.f32 %v873, %v921
  %v938 = vmul.f32 %v874, %v922
  %v939 = vmul.f32 %v875, %v923
  %v940 = vmul.f32 %v876, %v924
  %v941 = vmul.f32 %v877, %v925
  %v942 = vmul.f32 %v878, %v926
  %v943 = vmul.f32 %v879, %v927
  %v944 = vmul.f32 %v880, %v928
  %v945 = vmul.f32 %v881, %v929
  %v946 = vmul.f32 %v882, %v930
  %v947 = vmul.f32 %v883, %v931
  %v948 = vmul.f32 %v884, %v932
  %v949 = vmul.f32 %v885, %v933
  %950 = vst [vmem:[#allocation2] sm:$0xff] %v934
  %951 = vst [vmem:[#allocation2 + $0x8] sm:$0xff] %v935
  %952 = vst [vmem:[#allocation2 + $0x10] sm:$0xff] %v936
  %953 = vst [vmem:[#allocation2 + $0x18] sm:$0xff] %v937
  %954 = vst [vmem:[#allocation2 + $0x20] sm:$0xff] %v938
  %955 = vst [vmem:[#allocation2 + $0x28] sm:$0xff] %v939
  %956 = vst [vmem:[#allocation2 + $0x30] sm:$0xff] %v940
  %957 = vst [vmem:[#allocation2 + $0x38] sm:$0xff] %v941
  %958 = vst [vmem:[#allocation2 + $0x40] sm:$0xff] %v942
  %959 = vst [vmem:[#allocation2 + $0x48] sm:$0xff] %v943
  %960 = vst [vmem:[#allocation2 + $0x50] sm:$0xff] %v944
  %961 = vst [vmem:[#allocation2 + $0x58] sm:$0xff] %v945
  %962 = vst [vmem:[#allocation2 + $0x60] sm:$0xff] %v946
  %963 = vst [vmem:[#allocation2 + $0x68] sm:$0xff] %v947
  %964 = vst [vmem:[#allocation2 + $0x70] sm:$0xff] %v948
  %965 = vst [vmem:[#allocation2 + $0x78] sm:$0xff] %v949
  %v966 = vld [vmem:[#allocation2] sm:$0xff]
  %v967 = vld [vmem:[#allocation2 + $0x8] sm:$0xff]
  %v968 = vld [vmem:[#allocation2 + $0x10] sm:$0xff]
  %v969 = vld [vmem:[#allocation2 + $0x18] sm:$0xff]
  %v970 = vld [vmem:[#allocation2 + $0x20] sm:$0xff]
  %v971 = vld [vmem:[#allocation2 + $0x28] sm:$0xff]
  %v972 = vld [vmem:[#allocation2 + $0x30] sm:$0xff]
  %v973 = vld [vmem:[#allocation2 + $0x38] sm:$0xff]
  %v974 = vld [vmem:[#allocation2 + $0x40] sm:$0xff]
  %v975 = vld [vmem:[#allocation2 + $0x48] sm:$0xff]
  %v976 = vld [vmem:[#allocation2 + $0x50] sm:$0xff]
  %v977 = vld [vmem:[#allocation2 + $0x58] sm:$0xff]
  %v978 = vld [vmem:[#allocation2 + $0x60] sm:$0xff]
  %v979 = vld [vmem:[#allocation2 + $0x68] sm:$0xff]
  %v980 = vld [vmem:[#allocation2 + $0x70] sm:$0xff]
  %v981 = vld [vmem:[#allocation2 + $0x78] sm:$0xff]
  %982 = vst [vmem:[%s4] sm:$0xff] %v966
  %983 = vst [vmem:[%s4 + $0x8] sm:$0xff] %v967
  %984 = vst [vmem:[%s4 + $0x10] sm:$0xff] %v968
  %985 = vst [vmem:[%s4 + $0x18] sm:$0xff] %v969
  %986 = vst [vmem:[%s4 + $0x20] sm:$0xff] %v970
  %987 = vst [vmem:[%s4 + $0x28] sm:$0xff] %v971
  %988 = vst [vmem:[%s4 + $0x30] sm:$0xff] %v972
  %989 = vst [vmem:[%s4 + $0x38] sm:$0xff] %v973
  %990 = vst [vmem:[%s4 + $0x40] sm:$0xff] %v974
  %991 = vst [vmem:[%s4 + $0x48] sm:$0xff] %v975
  %992 = vst [vmem:[%s4 + $0x50] sm:$0xff] %v976
  %993 = vst [vmem:[%s4 + $0x58] sm:$0xff] %v977
  %994 = vst [vmem:[%s4 + $0x60] sm:$0xff] %v978
  %995 = vst [vmem:[%s4 + $0x68] sm:$0xff] %v979
  %996 = vst [vmem:[%s4 + $0x70] sm:$0xff] %v980
  %997 = vst [vmem:[%s4 + $0x78] sm:$0xff] %v981
  // Predicated region
  $region18: #{gcn_forward.1} parent=0 // pred_check
    _
  $region19: #{gcn_forward.1} parent=0 // pred_check_branch
    %999 = sbr.rel (0) target = $region21
  $region20: #{gcn_forward.1} parent=0 // pred_region
    _
  $region21: #{gcn_forward.1} parent=0 // pred_fallthru
    _
  // Predicated region
  $region22: #{gcn_forward.1} parent=0 // pred_check
    _
  $region23: #{gcn_forward.1} parent=0 // pred_check_branch
    %1001 = sbr.rel (0) target = $region25
  $region24: #{gcn_forward.1} parent=0 // pred_region
    _
  $region25: #{gcn_forward.1} parent=0 // pred_fallthru
    _

</llo_original>
